<compile_context>
chip_gen: v7x
topology: tpu7x:2x2x1
jax: 0.10.0
libtpu: 0.0.40
codegen_flags: <defaults>
</compile_context>

<pallas_src>
import jax
import jax.numpy as jnp
from jax.experimental import pallas as pl
from jax.experimental.pallas import tpu as pltpu


def avgpool_kernel(x_ref, o_ref):
    """Pool one channels-last tile.

    x_ref : (2*TO, 2*WO, TS, L)  zero-shifted (padded-frame) input tile
    o_ref : (TO,   WO,   TS, L)  output tile
    """
    to, wo, ts, l = o_ref.shape
    # f32 accumulation (matters for bf16/fp8 inputs; a no-op for f32).
    x = x_ref[...].astype(jnp.float32)
    # Split the leading (row, col) dims into (out, 2) window pairs.  The reshapes /
    # integer indexes only touch dims ahead of the (sublane, lane) = (TS, L) pair,
    # so they are tile-granular selections; the window sum is full-vreg VPU adds.
    r = x.reshape(to, 2, 2 * wo, ts, l)
    top = r[:, 0].reshape(to, wo, 2, ts, l)
    bot = r[:, 1].reshape(to, wo, 2, ts, l)
    win = (top[:, :, 0] + top[:, :, 1]) + (bot[:, :, 0] + bot[:, :, 1])
    # count_include_pad=True -> always divide by the full 2x2 window.
    o_ref[...] = (win * 0.25).astype(o_ref.dtype)


def avg_pool2d_k2_s2_p1(x, *, block_bytes=4 * 1024 * 1024,
                        vmem_limit_bytes=48 * 1024 * 1024):
    """Equivalent of torch.nn.AvgPool2d(2, padding=1) on NCHW input."""
    n, c, h, w = x.shape
    nc = n * c
    ho, wo = h // 2 + 1, w // 2 + 1          # floor((d + 2*1 - 2)/2) + 1
    wp = 2 * wo                              # padded width covered by the windows

    itemsize = jnp.dtype(x.dtype).itemsize
    sub_align = {4: 8, 2: 16, 1: 32}.get(itemsize, 8)   # dtype-aware sublane packing

    # ---- lane / sublane split of the N*C axis --------------------------------
    lane = 128
    l = lane if nc >= lane else nc           # small-NC case keeps the simple layout
    s_total = pl.cdiv(nc, l)

    # ---- tile selection: S first, then output rows of H (no halo needed) -----
    per_unit = 2 * wp * l * itemsize         # input bytes per output-row per S-group
    if s_total <= sub_align or per_unit * ho * s_total <= block_bytes:
        ts, num_s = s_total, 1
    else:
        ts_max = max(sub_align,
                     (block_bytes // (per_unit * ho)) // sub_align * sub_align)
        ts_max = min(ts_max, s_total)
        num_s = pl.cdiv(s_total, ts_max)
        ts = pl.cdiv(pl.cdiv(s_total, num_s), sub_align) * sub_align
    s_pad = num_s * ts

    if per_unit * ts * ho <= block_bytes:
        to, num_h = ho, 1
    else:
        to_max = max(1, block_bytes // (per_unit * ts))
        num_h = pl.cdiv(ho, to_max)
        to = pl.cdiv(ho, num_h)
    # v7x megacore: guarantee at least 2 parallel grid steps when possible.
    if num_s * num_h == 1 and ho >= 2:
        num_h = 2
        to = pl.cdiv(ho, num_h)
    ho_pad = num_h * to
    hp_pad = 2 * ho_pad

    # ---- layout: NCHW -> (H, W, NC), zero-shifted by the pad (one fused copy) --
    xcl = jnp.transpose(x.reshape(nc, h, w), (1, 2, 0))
    xcl = jnp.pad(xcl, ((1, hp_pad - h - 1), (1, wp - w - 1), (0, s_pad * l - nc)))
    x4 = xcl.reshape(hp_pad, wp, s_pad, l)

    cost = pl.CostEstimate(
        flops=4 * ho * wo * nc,
        transcendentals=0,
        bytes_accessed=(h * w + ho * wo) * nc * itemsize,
    )

    out4 = pl.pallas_call(
        avgpool_kernel,
        out_shape=jax.ShapeDtypeStruct((ho_pad, wo, s_pad, l), x.dtype),
        grid=(num_s, num_h),
        in_specs=[pl.BlockSpec((2 * to, wp, ts, l), lambda si, hi: (hi, 0, si, 0))],
        out_specs=pl.BlockSpec((to, wo, ts, l), lambda si, hi: (hi, 0, si, 0)),
        compiler_params=pltpu.CompilerParams(
            dimension_semantics=("parallel", "parallel"),
            vmem_limit_bytes=vmem_limit_bytes),
        cost_estimate=cost,
    )(x4)

    # Drop row / channel padding and return to NCHW.
    out = out4.reshape(ho_pad, wo, s_pad * l)[:ho, :, :nc]
    return jnp.transpose(out, (2, 0, 1)).reshape(n, c, ho, wo)


if __name__ == "__main__":
    key = jax.random.PRNGKey(0)
    x = jax.random.normal(key, (2, 4, 16, 16), dtype=jnp.float32)

    y = jax.block_until_ready(jax.jit(avg_pool2d_k2_s2_p1)(x))

    # Pure-JAX reference of AvgPool2d(2, padding=1), count_include_pad=True.
    xpad = jnp.pad(x, ((0, 0), (0, 0), (1, 1), (1, 1)))
    ref = 0.25 * (xpad[:, :, 0::2, 0::2] + xpad[:, :, 0::2, 1::2]
                  + xpad[:, :, 1::2, 0::2] + xpad[:, :, 1::2, 1::2])

    assert y.shape == (2, 4, 9, 9), y.shape
    assert jnp.allclose(y, ref, atol=1e-5, rtol=1e-5)
    print("KERNEL_OK")
</pallas_src>

<mosaic_0001>
module attributes {stable_mosaic.version = 11 : i64} {
  func.func @avgpool_kernel(%arg0: i32, %arg1: i32, %arg2: memref<10x18x1x8xf32, #tpu.memory_space<vmem>>, %arg3: memref<5x9x1x8xf32, #tpu.memory_space<vmem>>) attributes {dimension_semantics = [#tpu.dimension_semantics<parallel>, #tpu.dimension_semantics<parallel>], iteration_bounds = array<i64: 1, 2>, scalar_prefetch = 0 : i64, scratch_operands = 0 : i64, tpu.core_type = #tpu.core_type<tc>, window_params = [{transform_indices = @transform_0, window_bounds = array<i64: 10, 18, 1, 8>}, {transform_indices = @transform_1, window_bounds = array<i64: 5, 9, 1, 8>}]} {
    %c0 = arith.constant 0 : index
    %c0_0 = arith.constant 0 : index
    %c0_1 = arith.constant 0 : index
    %c0_2 = arith.constant 0 : index
    %0 = vector.load %arg2[%c0, %c0_0, %c0_1, %c0_2] : memref<10x18x1x8xf32, #tpu.memory_space<vmem>>, vector<10x18x1x8xf32>
    %1 = vector.shape_cast %0 : vector<10x18x1x8xf32> to vector<5x2x18x1x8xf32>
    %2 = vector.extract_strided_slice %1 {offsets = [0, 0, 0, 0, 0], sizes = [5, 1, 18, 1, 8], strides = [1, 1, 1, 1, 1]} : vector<5x2x18x1x8xf32> to vector<5x1x18x1x8xf32>
    %3 = vector.shape_cast %2 : vector<5x1x18x1x8xf32> to vector<5x18x1x8xf32>
    %4 = vector.shape_cast %3 : vector<5x18x1x8xf32> to vector<5x9x2x1x8xf32>
    %5 = vector.extract_strided_slice %1 {offsets = [0, 1, 0, 0, 0], sizes = [5, 1, 18, 1, 8], strides = [1, 1, 1, 1, 1]} : vector<5x2x18x1x8xf32> to vector<5x1x18x1x8xf32>
    %6 = vector.shape_cast %5 : vector<5x1x18x1x8xf32> to vector<5x18x1x8xf32>
    %7 = vector.shape_cast %6 : vector<5x18x1x8xf32> to vector<5x9x2x1x8xf32>
    %8 = vector.extract_strided_slice %4 {offsets = [0, 0, 0, 0, 0], sizes = [5, 9, 1, 1, 8], strides = [1, 1, 1, 1, 1]} : vector<5x9x2x1x8xf32> to vector<5x9x1x1x8xf32>
    %9 = vector.shape_cast %8 : vector<5x9x1x1x8xf32> to vector<5x9x1x8xf32>
    %10 = vector.extract_strided_slice %4 {offsets = [0, 0, 1, 0, 0], sizes = [5, 9, 1, 1, 8], strides = [1, 1, 1, 1, 1]} : vector<5x9x2x1x8xf32> to vector<5x9x1x1x8xf32>
    %11 = vector.shape_cast %10 : vector<5x9x1x1x8xf32> to vector<5x9x1x8xf32>
    %12 = arith.addf %9, %11 : vector<5x9x1x8xf32>
    %13 = vector.extract_strided_slice %7 {offsets = [0, 0, 0, 0, 0], sizes = [5, 9, 1, 1, 8], strides = [1, 1, 1, 1, 1]} : vector<5x9x2x1x8xf32> to vector<5x9x1x1x8xf32>
    %14 = vector.shape_cast %13 : vector<5x9x1x1x8xf32> to vector<5x9x1x8xf32>
    %15 = vector.extract_strided_slice %7 {offsets = [0, 0, 1, 0, 0], sizes = [5, 9, 1, 1, 8], strides = [1, 1, 1, 1, 1]} : vector<5x9x2x1x8xf32> to vector<5x9x1x1x8xf32>
    %16 = vector.shape_cast %15 : vector<5x9x1x1x8xf32> to vector<5x9x1x8xf32>
    %17 = arith.addf %14, %16 : vector<5x9x1x8xf32>
    %18 = arith.addf %12, %17 : vector<5x9x1x8xf32>
    %cst = arith.constant 2.500000e-01 : f32
    %19 = vector.broadcast %cst : f32 to vector<5x9x1x8xf32>
    %20 = arith.mulf %18, %19 : vector<5x9x1x8xf32>
    %c0_3 = arith.constant 0 : index
    %c0_4 = arith.constant 0 : index
    %c0_5 = arith.constant 0 : index
    %c0_6 = arith.constant 0 : index
    %21 = vector.load %arg3[%c0_3, %c0_4, %c0_5, %c0_6] : memref<5x9x1x8xf32, #tpu.memory_space<vmem>>, vector<5x9x1x8xf32>
    tpu.vector_store %arg3[%c0_3, %c0_4, %c0_5, %c0_6], %20 {strides = array<i32>} : memref<5x9x1x8xf32, #tpu.memory_space<vmem>>, vector<5x9x1x8xf32>,
    return
  }
  func.func @transform_0(%arg0: i32, %arg1: i32) -> (i32, i32, i32, i32) {
    %c0_i32 = arith.constant 0 : i32
    %c0_i32_0 = arith.constant 0 : i32
    %c0_i32_1 = arith.constant 0 : i32
    return %arg1, %c0_i32, %arg0, %c0_i32_0 : i32, i32, i32, i32
  }
  func.func @transform_1(%arg0: i32, %arg1: i32) -> (i32, i32, i32, i32) {
    %c0_i32 = arith.constant 0 : i32
    %c0_i32_0 = arith.constant 0 : i32
    %c0_i32_1 = arith.constant 0 : i32
    return %arg1, %c0_i32, %arg0, %c0_i32_0 : i32, i32, i32, i32
  }
}

</mosaic_0001>

<llo_original>
// kernel: avg_pool2d_k2_s2_p1.1
$region0: #{avg_pool2d_k2_s2_p1.1}
  #allocation0 [shape = 'u32[]', space=smem, size = 0x4, offset = 0x4, fixed_abs, tag = 'smem constant byte address 0x4 - core index']
  #allocation1 [shape = 'u32[144,128]{1,0:T(1,128)}', space=vmem, size = 0x12000, scoped, tag = 'internal scratch']
  %s0 = inlined_call_operand.vmem [shape: f32[20,18,1,8], index: 0, kind: input, shape index: {}]
  %s1 = inlined_call_operand.vmem [shape: f32[10,9,1,8], index: 1, kind: output, shape index: {}]
  %s2 = sld [smem:[#allocation0]]
  $region37: #{avg_pool2d_k2_s2_p1.1} parent=0
    _
  %s4 = ssub.s32 1, %s2
  %s5 = scalar_select 0, %s4, %s2
  loop: start=0, step=1, limit=4
  $region2: #{avg_pool2d_k2_s2_p1.1} parent=0 // loop_pre_header
    _
  $region3: #{avg_pool2d_k2_s2_p1.1} parent=0 // loop_header
    %s7 = sphi 0, %s11
    %p8 = scmp.ge.s32.totalorder %s7, 4
    %s14 = sphi 0, %s26
    %s15 = sphi 0, %s22
    %s16 = sphi 0, %s14
    %s17 = sphi 0, %s15
    %s18 = sphi 0, %s16
    %s19 = sphi 0, %s17
    %s31 = sphi 0, %s33
    %s34 = sphi 0, %s31
    %s35 = sphi 0, %s34
    %s51 = sphi 0, %s35
    %s59 = sphi 0, %s61
    %s62 = sphi 0, %s59
    %s63 = sphi 0, %s62
    %s79 = sphi 0, %s63
  $region4: #{avg_pool2d_k2_s2_p1.1} parent=0 // loop_header_branch
    %10 = sbr.rel (%p8) target = $region8
  $region5: #{avg_pool2d_k2_s2_p1.1} parent=0 // loop_body
    %s12 = ssub.s32 %s7, 1
    %s13 = ssub.s32 %s7, 2
    %s20 = sadd.s32 1, %s15
    %p21 = scmp.ge.s32.totalorder %s20, 2
    %s22 = scalar_select %p21, 0, %s20
    %s23 = sadd.s32 1, %s14
    %s24 = scalar_select %p21, %s23, %s14
    %p25 = scmp.ge.s32.totalorder %s24, 1
    %s26 = scalar_select %p25, 0, %s24
    %s27 = ssub.s32 %s15, %s22
    %s28 = ssub.s32 %s14, %s26
    %s29 = sor.u32 %s27, %s28
    %p30 = scmp.eq.s32.totalorder %s29, 0
    %s32 = sadd.s32 %s31, 1
    %s33 = scalar_select %p30, %s31, %s32
    %p36 = pneg %p30
    %p37 = scmp.eq.s32.totalorder %s7, 1
    %p38 = por %p36, %p37
    %p39 = scmp.ne.s32.totalorder %s31, %s34
    %p40 = scmp.eq.s32.totalorder %s7, 0
    %p41 = por %p39, %p40
    %p42 = scmp.ne.s32.totalorder %s31, %s34
    %p43 = scmp.eq.s32.totalorder %s12, 1
    %p44 = por %p42, %p43
    %p45 = scmp.ne.s32.totalorder %s34, %s35
    %p46 = scmp.eq.s32.totalorder %s12, 0
    %p47 = por %p45, %p46
    %p48 = scmp.ne.s32.totalorder %s34, %s35
    %p49 = scmp.eq.s32.totalorder %s13, 1
    %p50 = por %p48, %p49
    %p52 = scmp.ne.s32.totalorder %s35, %s51
    %p53 = scmp.eq.s32.totalorder %s13, 0
    %p54 = por %p52, %p53
    %s55 = ssub.s32 %s15, %s22
    %s56 = ssub.s32 %s14, %s26
    %s57 = sor.u32 %s55, %s56
    %p58 = scmp.eq.s32.totalorder %s57, 0
    %s60 = sadd.s32 %s59, 1
    %s61 = scalar_select %p58, %s59, %s60
    %p64 = pneg %p58
    %p65 = scmp.eq.s32.totalorder %s7, 1
    %p66 = por %p64, %p65
    %p67 = scmp.ne.s32.totalorder %s59, %s62
    %p68 = scmp.eq.s32.totalorder %s7, 0
    %p69 = por %p67, %p68
    %p70 = scmp.ne.s32.totalorder %s59, %s62
    %p71 = scmp.eq.s32.totalorder %s12, 1
    %p72 = por %p70, %p71
    %p73 = scmp.ne.s32.totalorder %s62, %s63
    %p74 = scmp.eq.s32.totalorder %s12, 0
    %p75 = por %p73, %p74
    %p76 = scmp.ne.s32.totalorder %s62, %s63
    %p77 = scmp.eq.s32.totalorder %s13, 1
    %p78 = por %p76, %p77
    %p80 = scmp.ne.s32.totalorder %s63, %s79
    %p81 = scmp.eq.s32.totalorder %s13, 0
    %p82 = por %p80, %p81
    %p83 = scmp.le.s32.totalorder 1, %s7
    %p84 = scmp.lt.s32.totalorder %s7, 3
    %p85 = pnand %p83, %p84
    %p86 = pneg %p85
    // Predicated region
    $region9: #{avg_pool2d_k2_s2_p1.1} parent=5 // pred_check
      _
    $region10: #{avg_pool2d_k2_s2_p1.1} parent=5 // pred_check_branch
      %88 = sbr.rel (%p85) target = $region12
    $region11: #{avg_pool2d_k2_s2_p1.1} parent=5 // pred_region
      %s89 = ssub.s32 %s7, 1
    $region12: #{avg_pool2d_k2_s2_p1.1} parent=5 // pred_fallthru
      _
    %p90 = scmp.lt.s32.totalorder %s7, 2
    // Predicated region
    $region13: #{avg_pool2d_k2_s2_p1.1} parent=5 // pred_check
      %p91 = pneg %p90
    $region14: #{avg_pool2d_k2_s2_p1.1} parent=5 // pred_check_branch
      %93 = sbr.rel (%p91) target = $region16
    $region15: #{avg_pool2d_k2_s2_p1.1} parent=5 // pred_region
      // Predicated region
      $region17: #{avg_pool2d_k2_s2_p1.1} parent=15 // pred_check
        %p94 = pneg %p41
      $region18: #{avg_pool2d_k2_s2_p1.1} parent=15 // pred_check_branch
        %96 = sbr.rel (%p94) target = $region20
      $region19: #{avg_pool2d_k2_s2_p1.1} parent=15 // pred_region
        %s97 = smul.u32 10, %s15
        %p98 = scmp.lt.s32.totalorder %s97, 19
        %s99 = scalar_select %p98, %s97, 19
        %p100 = scmp.lt.s32.totalorder %s14, 0
        %s101 = scalar_select %p100, %s14, 0
        %s102 = smul.addr %s99, 18
        %s103 = sadd.s32 %s101, %s102
        %s104 = scalar_lea.vmem %s0, %s103
        %s105 = smul.u32 10, %s15
      $region20: #{avg_pool2d_k2_s2_p1.1} parent=15 // pred_fallthru
        _
    $region16: #{avg_pool2d_k2_s2_p1.1} parent=5 // pred_fallthru
      _
    %p106 = scmp.le.s32.totalorder 1, %s7
    %p107 = scmp.lt.s32.totalorder %s7, 3
    %p108 = pnand %p106, %p107
    %p109 = pneg %p108
    // Predicated region
    $region21: #{avg_pool2d_k2_s2_p1.1} parent=5 // pred_check
      _
    $region22: #{avg_pool2d_k2_s2_p1.1} parent=5 // pred_check_branch
      %111 = sbr.rel (%p108) target = $region24
    $region23: #{avg_pool2d_k2_s2_p1.1} parent=5 // pred_region
      %s112 = ssub.s32 %s7, 1
      %s113 = smul.u32 10, %s17
      %p114 = scmp.lt.s32.totalorder %s113, 19
      %s115 = scalar_select %p114, %s113, 19
      %p116 = scmp.lt.s32.totalorder %s16, 0
      %s117 = scalar_select %p116, %s16, 0
      %s118 = smul.addr %s115, 18
      %s119 = sadd.s32 %s117, %s118
      %s120 = scalar_lea.vmem %s0, %s119
      %p121 = pneg %p47
      %p122 = pneg %p44
      %p123 = pneg %p75
      %p124 = pneg %p72
      %s125 = smul.u32 5, %s17
      %p126 = scmp.lt.s32.totalorder %s125, 9
      %s127 = scalar_select %p126, %s125, 9
      %p128 = scmp.lt.s32.totalorder %s16, 0
      %s129 = scalar_select %p128, %s16, 0
      %s130 = smul.addr %s127, 9
      %s131 = sadd.s32 %s129, %s130
      %s132 = scalar_lea.vmem %s1, %s131
      %s133 = smul.u32 10, %s17
      %p134 = scmp.lt.s32.totalorder %s133, 19
      %s135 = scalar_select %p134, %s133, 19
      %p136 = scmp.lt.s32.totalorder %s16, 0
      %s137 = scalar_select %p136, %s16, 0
      %s138 = smul.addr %s135, 18
      %s139 = sadd.s32 %s137, %s138
      %s140 = scalar_lea.vmem %s0, %s139
      %s141 = smul.u32 10, %s17
      %s142 = smul.u32 5, %s17
      %p143 = scmp.lt.s32.totalorder %s142, 9
      %s144 = scalar_select %p143, %s142, 9
      %p145 = scmp.lt.s32.totalorder %s16, 0
      %s146 = scalar_select %p145, %s16, 0
      %s147 = smul.addr %s144, 9
      %s148 = sadd.s32 %s146, %s147
      %s149 = scalar_lea.vmem %s1, %s148
      %s150 = smul.u32 5, %s17
      %v151 = vld [vmem:[%s140] sm:$0x1]
      %v152 = vld [vmem:[%s140 + $0x1] sm:$0x1]
      %v153 = vld [vmem:[%s140 + $0x2] sm:$0x1]
      %v154 = vld [vmem:[%s140 + $0x3] sm:$0x1]
      %v155 = vld [vmem:[%s140 + $0x4] sm:$0x1]
      %v156 = vld [vmem:[%s140 + $0x5] sm:$0x1]
      %v157 = vld [vmem:[%s140 + $0x6] sm:$0x1]
      %v158 = vld [vmem:[%s140 + $0x7] sm:$0x1]
      %v159 = vld [vmem:[%s140 + $0x8] sm:$0x1]
      %v160 = vld [vmem:[%s140 + $0x9] sm:$0x1]
      %v161 = vld [vmem:[%s140 + $0xa] sm:$0x1]
      %v162 = vld [vmem:[%s140 + $0xb] sm:$0x1]
      %v163 = vld [vmem:[%s140 + $0xc] sm:$0x1]
      %v164 = vld [vmem:[%s140 + $0xd] sm:$0x1]
      %v165 = vld [vmem:[%s140 + $0xe] sm:$0x1]
      %v166 = vld [vmem:[%s140 + $0xf] sm:$0x1]
      %v167 = vld [vmem:[%s140 + $0x10] sm:$0x1]
      %v168 = vld [vmem:[%s140 + $0x11] sm:$0x1]
      %v169 = vld [vmem:[%s140 + $0x12] sm:$0x1]
      %v170 = vld [vmem:[%s140 + $0x13] sm:$0x1]
      %v171 = vld [vmem:[%s140 + $0x14] sm:$0x1]
      %v172 = vld [vmem:[%s140 + $0x15] sm:$0x1]
      %v173 = vld [vmem:[%s140 + $0x16] sm:$0x1]
      %v174 = vld [vmem:[%s140 + $0x17] sm:$0x1]
      %v175 = vld [vmem:[%s140 + $0x18] sm:$0x1]
      %v176 = vld [vmem:[%s140 + $0x19] sm:$0x1]
      %v177 = vld [vmem:[%s140 + $0x1a] sm:$0x1]
      %v178 = vld [vmem:[%s140 + $0x1b] sm:$0x1]
      %v179 = vld [vmem:[%s140 + $0x1c] sm:$0x1]
      %v180 = vld [vmem:[%s140 + $0x1d] sm:$0x1]
      %v181 = vld [vmem:[%s140 + $0x1e] sm:$0x1]
      %v182 = vld [vmem:[%s140 + $0x1f] sm:$0x1]
      %v183 = vld [vmem:[%s140 + $0x20] sm:$0x1]
      %v184 = vld [vmem:[%s140 + $0x21] sm:$0x1]
      %v185 = vld [vmem:[%s140 + $0x22] sm:$0x1]
      %v186 = vld [vmem:[%s140 + $0x23] sm:$0x1]
      %v187 = vld [vmem:[%s140 + $0x24] sm:$0x1]
      %v188 = vld [vmem:[%s140 + $0x25] sm:$0x1]
      %v189 = vld [vmem:[%s140 + $0x26] sm:$0x1]
      %v190 = vld [vmem:[%s140 + $0x27] sm:$0x1]
      %v191 = vld [vmem:[%s140 + $0x28] sm:$0x1]
      %v192 = vld [vmem:[%s140 + $0x29] sm:$0x1]
      %v193 = vld [vmem:[%s140 + $0x2a] sm:$0x1]
      %v194 = vld [vmem:[%s140 + $0x2b] sm:$0x1]
      %v195 = vld [vmem:[%s140 + $0x2c] sm:$0x1]
      %v196 = vld [vmem:[%s140 + $0x2d] sm:$0x1]
      %v197 = vld [vmem:[%s140 + $0x2e] sm:$0x1]
      %v198 = vld [vmem:[%s140 + $0x2f] sm:$0x1]
      %v199 = vld [vmem:[%s140 + $0x30] sm:$0x1]
      %v200 = vld [vmem:[%s140 + $0x31] sm:$0x1]
      %v201 = vld [vmem:[%s140 + $0x32] sm:$0x1]
      %v202 = vld [vmem:[%s140 + $0x33] sm:$0x1]
      %v203 = vld [vmem:[%s140 + $0x34] sm:$0x1]
      %v204 = vld [vmem:[%s140 + $0x35] sm:$0x1]
      %v205 = vld [vmem:[%s140 + $0x36] sm:$0x1]
      %v206 = vld [vmem:[%s140 + $0x37] sm:$0x1]
      %v207 = vld [vmem:[%s140 + $0x38] sm:$0x1]
      %v208 = vld [vmem:[%s140 + $0x39] sm:$0x1]
      %v209 = vld [vmem:[%s140 + $0x3a] sm:$0x1]
      %v210 = vld [vmem:[%s140 + $0x3b] sm:$0x1]
      %v211 = vld [vmem:[%s140 + $0x3c] sm:$0x1]
      %v212 = vld [vmem:[%s140 + $0x3d] sm:$0x1]
      %v213 = vld [vmem:[%s140 + $0x3e] sm:$0x1]
      %v214 = vld [vmem:[%s140 + $0x3f] sm:$0x1]
      %v215 = vld [vmem:[%s140 + $0x40] sm:$0x1]
      %v216 = vld [vmem:[%s140 + $0x41] sm:$0x1]
      %v217 = vld [vmem:[%s140 + $0x42] sm:$0x1]
      %v218 = vld [vmem:[%s140 + $0x43] sm:$0x1]
      %v219 = vld [vmem:[%s140 + $0x44] sm:$0x1]
      %v220 = vld [vmem:[%s140 + $0x45] sm:$0x1]
      %v221 = vld [vmem:[%s140 + $0x46] sm:$0x1]
      %v222 = vld [vmem:[%s140 + $0x47] sm:$0x1]
      %v223 = vld [vmem:[%s140 + $0x48] sm:$0x1]
      %v224 = vld [vmem:[%s140 + $0x49] sm:$0x1]
      %v225 = vld [vmem:[%s140 + $0x4a] sm:$0x1]
      %v226 = vld [vmem:[%s140 + $0x4b] sm:$0x1]
      %v227 = vld [vmem:[%s140 + $0x4c] sm:$0x1]
      %v228 = vld [vmem:[%s140 + $0x4d] sm:$0x1]
      %v229 = vld [vmem:[%s140 + $0x4e] sm:$0x1]
      %v230 = vld [vmem:[%s140 + $0x4f] sm:$0x1]
      %v231 = vld [vmem:[%s140 + $0x50] sm:$0x1]
      %v232 = vld [vmem:[%s140 + $0x51] sm:$0x1]
      %v233 = vld [vmem:[%s140 + $0x52] sm:$0x1]
      %v234 = vld [vmem:[%s140 + $0x53] sm:$0x1]
      %v235 = vld [vmem:[%s140 + $0x54] sm:$0x1]
      %v236 = vld [vmem:[%s140 + $0x55] sm:$0x1]
      %v237 = vld [vmem:[%s140 + $0x56] sm:$0x1]
      %v238 = vld [vmem:[%s140 + $0x57] sm:$0x1]
      %v239 = vld [vmem:[%s140 + $0x58] sm:$0x1]
      %v240 = vld [vmem:[%s140 + $0x59] sm:$0x1]
      %v241 = vld [vmem:[%s140 + $0x5a] sm:$0x1]
      %v242 = vld [vmem:[%s140 + $0x5b] sm:$0x1]
      %v243 = vld [vmem:[%s140 + $0x5c] sm:$0x1]
      %v244 = vld [vmem:[%s140 + $0x5d] sm:$0x1]
      %v245 = vld [vmem:[%s140 + $0x5e] sm:$0x1]
      %v246 = vld [vmem:[%s140 + $0x5f] sm:$0x1]
      %v247 = vld [vmem:[%s140 + $0x60] sm:$0x1]
      %v248 = vld [vmem:[%s140 + $0x61] sm:$0x1]
      %v249 = vld [vmem:[%s140 + $0x62] sm:$0x1]
      %v250 = vld [vmem:[%s140 + $0x63] sm:$0x1]
      %v251 = vld [vmem:[%s140 + $0x64] sm:$0x1]
      %v252 = vld [vmem:[%s140 + $0x65] sm:$0x1]
      %v253 = vld [vmem:[%s140 + $0x66] sm:$0x1]
      %v254 = vld [vmem:[%s140 + $0x67] sm:$0x1]
      %v255 = vld [vmem:[%s140 + $0x68] sm:$0x1]
      %v256 = vld [vmem:[%s140 + $0x69] sm:$0x1]
      %v257 = vld [vmem:[%s140 + $0x6a] sm:$0x1]
      %v258 = vld [vmem:[%s140 + $0x6b] sm:$0x1]
      %v259 = vld [vmem:[%s140 + $0x6c] sm:$0x1]
      %v260 = vld [vmem:[%s140 + $0x6d] sm:$0x1]
      %v261 = vld [vmem:[%s140 + $0x6e] sm:$0x1]
      %v262 = vld [vmem:[%s140 + $0x6f] sm:$0x1]
      %v263 = vld [vmem:[%s140 + $0x70] sm:$0x1]
      %v264 = vld [vmem:[%s140 + $0x71] sm:$0x1]
      %v265 = vld [vmem:[%s140 + $0x72] sm:$0x1]
      %v266 = vld [vmem:[%s140 + $0x73] sm:$0x1]
      %v267 = vld [vmem:[%s140 + $0x74] sm:$0x1]
      %v268 = vld [vmem:[%s140 + $0x75] sm:$0x1]
      %v269 = vld [vmem:[%s140 + $0x76] sm:$0x1]
      %v270 = vld [vmem:[%s140 + $0x77] sm:$0x1]
      %v271 = vld [vmem:[%s140 + $0x78] sm:$0x1]
      %v272 = vld [vmem:[%s140 + $0x79] sm:$0x1]
      %v273 = vld [vmem:[%s140 + $0x7a] sm:$0x1]
      %v274 = vld [vmem:[%s140 + $0x7b] sm:$0x1]
      %v275 = vld [vmem:[%s140 + $0x7c] sm:$0x1]
      %v276 = vld [vmem:[%s140 + $0x7d] sm:$0x1]
      %v277 = vld [vmem:[%s140 + $0x7e] sm:$0x1]
      %v278 = vld [vmem:[%s140 + $0x7f] sm:$0x1]
      %v279 = vld [vmem:[%s140 + $0x80] sm:$0x1]
      %v280 = vld [vmem:[%s140 + $0x81] sm:$0x1]
      %v281 = vld [vmem:[%s140 + $0x82] sm:$0x1]
      %v282 = vld [vmem:[%s140 + $0x83] sm:$0x1]
      %v283 = vld [vmem:[%s140 + $0x84] sm:$0x1]
      %v284 = vld [vmem:[%s140 + $0x85] sm:$0x1]
      %v285 = vld [vmem:[%s140 + $0x86] sm:$0x1]
      %v286 = vld [vmem:[%s140 + $0x87] sm:$0x1]
      %v287 = vld [vmem:[%s140 + $0x88] sm:$0x1]
      %v288 = vld [vmem:[%s140 + $0x89] sm:$0x1]
      %v289 = vld [vmem:[%s140 + $0x8a] sm:$0x1]
      %v290 = vld [vmem:[%s140 + $0x8b] sm:$0x1]
      %v291 = vld [vmem:[%s140 + $0x8c] sm:$0x1]
      %v292 = vld [vmem:[%s140 + $0x8d] sm:$0x1]
      %v293 = vld [vmem:[%s140 + $0x8e] sm:$0x1]
      %v294 = vld [vmem:[%s140 + $0x8f] sm:$0x1]
      %v295 = vld [vmem:[%s140 + $0x90] sm:$0x1]
      %v296 = vld [vmem:[%s140 + $0x91] sm:$0x1]
      %v297 = vld [vmem:[%s140 + $0x92] sm:$0x1]
      %v298 = vld [vmem:[%s140 + $0x93] sm:$0x1]
      %v299 = vld [vmem:[%s140 + $0x94] sm:$0x1]
      %v300 = vld [vmem:[%s140 + $0x95] sm:$0x1]
      %v301 = vld [vmem:[%s140 + $0x96] sm:$0x1]
      %v302 = vld [vmem:[%s140 + $0x97] sm:$0x1]
      %v303 = vld [vmem:[%s140 + $0x98] sm:$0x1]
      %v304 = vld [vmem:[%s140 + $0x99] sm:$0x1]
      %v305 = vld [vmem:[%s140 + $0x9a] sm:$0x1]
      %v306 = vld [vmem:[%s140 + $0x9b] sm:$0x1]
      %v307 = vld [vmem:[%s140 + $0x9c] sm:$0x1]
      %v308 = vld [vmem:[%s140 + $0x9d] sm:$0x1]
      %v309 = vld [vmem:[%s140 + $0x9e] sm:$0x1]
      %v310 = vld [vmem:[%s140 + $0x9f] sm:$0x1]
      %v311 = vld [vmem:[%s140 + $0xa0] sm:$0x1]
      %v312 = vld [vmem:[%s140 + $0xa1] sm:$0x1]
      %v313 = vld [vmem:[%s140 + $0xa2] sm:$0x1]
      %v314 = vld [vmem:[%s140 + $0xa3] sm:$0x1]
      %v315 = vld [vmem:[%s140 + $0xa4] sm:$0x1]
      %v316 = vld [vmem:[%s140 + $0xa5] sm:$0x1]
      %v317 = vld [vmem:[%s140 + $0xa6] sm:$0x1]
      %v318 = vld [vmem:[%s140 + $0xa7] sm:$0x1]
      %v319 = vld [vmem:[%s140 + $0xa8] sm:$0x1]
      %v320 = vld [vmem:[%s140 + $0xa9] sm:$0x1]
      %v321 = vld [vmem:[%s140 + $0xaa] sm:$0x1]
      %v322 = vld [vmem:[%s140 + $0xab] sm:$0x1]
      %v323 = vld [vmem:[%s140 + $0xac] sm:$0x1]
      %v324 = vld [vmem:[%s140 + $0xad] sm:$0x1]
      %v325 = vld [vmem:[%s140 + $0xae] sm:$0x1]
      %v326 = vld [vmem:[%s140 + $0xaf] sm:$0x1]
      %v327 = vld [vmem:[%s140 + $0xb0] sm:$0x1]
      %v328 = vld [vmem:[%s140 + $0xb1] sm:$0x1]
      %v329 = vld [vmem:[%s140 + $0xb2] sm:$0x1]
      %v330 = vld [vmem:[%s140 + $0xb3] sm:$0x1]
      %v331 = vadd.f32 %v151, %v152
      %v332 = vadd.f32 %v153, %v154
      %v333 = vadd.f32 %v155, %v156
      %v334 = vadd.f32 %v157, %v158
      %v335 = vadd.f32 %v159, %v160
      %v336 = vadd.f32 %v161, %v162
      %v337 = vadd.f32 %v163, %v164
      %v338 = vadd.f32 %v165, %v166
      %v339 = vadd.f32 %v167, %v168
      %v340 = vadd.f32 %v187, %v188
      %v341 = vadd.f32 %v189, %v190
      %v342 = vadd.f32 %v191, %v192
      %v343 = vadd.f32 %v193, %v194
      %v344 = vadd.f32 %v195, %v196
      %v345 = vadd.f32 %v197, %v198
      %v346 = vadd.f32 %v199, %v200
      %v347 = vadd.f32 %v201, %v202
      %v348 = vadd.f32 %v203, %v204
      %v349 = vadd.f32 %v223, %v224
      %v350 = vadd.f32 %v225, %v226
      %v351 = vadd.f32 %v227, %v228
      %v352 = vadd.f32 %v229, %v230
      %v353 = vadd.f32 %v231, %v232
      %v354 = vadd.f32 %v233, %v234
      %v355 = vadd.f32 %v235, %v236
      %v356 = vadd.f32 %v237, %v238
      %v357 = vadd.f32 %v239, %v240
      %v358 = vadd.f32 %v259, %v260
      %v359 = vadd.f32 %v261, %v262
      %v360 = vadd.f32 %v263, %v264
      %v361 = vadd.f32 %v265, %v266
      %v362 = vadd.f32 %v267, %v268
      %v363 = vadd.f32 %v269, %v270
      %v364 = vadd.f32 %v271, %v272
      %v365 = vadd.f32 %v273, %v274
      %v366 = vadd.f32 %v275, %v276
      %v367 = vadd.f32 %v295, %v296
      %v368 = vadd.f32 %v297, %v298
      %v369 = vadd.f32 %v299, %v300
      %v370 = vadd.f32 %v301, %v302
      %v371 = vadd.f32 %v303, %v304
      %v372 = vadd.f32 %v305, %v306
      %v373 = vadd.f32 %v307, %v308
      %v374 = vadd.f32 %v309, %v310
      %v375 = vadd.f32 %v311, %v312
      %v376 = vadd.f32 %v169, %v170
      %v377 = vadd.f32 %v171, %v172
      %v378 = vadd.f32 %v173, %v174
      %v379 = vadd.f32 %v175, %v176
      %v380 = vadd.f32 %v177, %v178
      %v381 = vadd.f32 %v179, %v180
      %v382 = vadd.f32 %v181, %v182
      %v383 = vadd.f32 %v183, %v184
      %v384 = vadd.f32 %v185, %v186
      %v385 = vadd.f32 %v205, %v206
      %v386 = vadd.f32 %v207, %v208
      %v387 = vadd.f32 %v209, %v210
      %v388 = vadd.f32 %v211, %v212
      %v389 = vadd.f32 %v213, %v214
      %v390 = vadd.f32 %v215, %v216
      %v391 = vadd.f32 %v217, %v218
      %v392 = vadd.f32 %v219, %v220
      %v393 = vadd.f32 %v221, %v222
      %v394 = vadd.f32 %v241, %v242
      %v395 = vadd.f32 %v243, %v244
      %v396 = vadd.f32 %v245, %v246
      %v397 = vadd.f32 %v247, %v248
      %v398 = vadd.f32 %v249, %v250
      %v399 = vadd.f32 %v251, %v252
      %v400 = vadd.f32 %v253, %v254
      %v401 = vadd.f32 %v255, %v256
      %v402 = vadd.f32 %v257, %v258
      %v403 = vadd.f32 %v277, %v278
      %v404 = vadd.f32 %v279, %v280
      %v405 = vadd.f32 %v281, %v282
      %v406 = vadd.f32 %v283, %v284
      %v407 = vadd.f32 %v285, %v286
      %v408 = vadd.f32 %v287, %v288
      %v409 = vadd.f32 %v289, %v290
      %v410 = vadd.f32 %v291, %v292
      %v411 = vadd.f32 %v293, %v294
      %v412 = vadd.f32 %v313, %v314
      %v413 = vadd.f32 %v315, %v316
      %v414 = vadd.f32 %v317, %v318
      %v415 = vadd.f32 %v319, %v320
      %v416 = vadd.f32 %v321, %v322
      %v417 = vadd.f32 %v323, %v324
      %v418 = vadd.f32 %v325, %v326
      %v419 = vadd.f32 %v327, %v328
      %v420 = vadd.f32 %v329, %v330
      %v421 = vadd.f32 %v331, %v376
      %v422 = vadd.f32 %v332, %v377
      %v423 = vadd.f32 %v333, %v378
      %v424 = vadd.f32 %v334, %v379
      %v425 = vadd.f32 %v335, %v380
      %v426 = vadd.f32 %v336, %v381
      %v427 = vadd.f32 %v337, %v382
      %v428 = vadd.f32 %v338, %v383
      %v429 = vadd.f32 %v339, %v384
      %v430 = vadd.f32 %v340, %v385
      %v431 = vadd.f32 %v341, %v386
      %v432 = vadd.f32 %v342, %v387
      %v433 = vadd.f32 %v343, %v388
      %v434 = vadd.f32 %v344, %v389
      %v435 = vadd.f32 %v345, %v390
      %v436 = vadd.f32 %v346, %v391
      %v437 = vadd.f32 %v347, %v392
      %v438 = vadd.f32 %v348, %v393
      %v439 = vadd.f32 %v349, %v394
      %v440 = vadd.f32 %v350, %v395
      %v441 = vadd.f32 %v351, %v396
      %v442 = vadd.f32 %v352, %v397
      %v443 = vadd.f32 %v353, %v398
      %v444 = vadd.f32 %v354, %v399
      %v445 = vadd.f32 %v355, %v400
      %v446 = vadd.f32 %v356, %v401
      %v447 = vadd.f32 %v357, %v402
      %v448 = vadd.f32 %v358, %v403
      %v449 = vadd.f32 %v359, %v404
      %v450 = vadd.f32 %v360, %v405
      %v451 = vadd.f32 %v361, %v406
      %v452 = vadd.f32 %v362, %v407
      %v453 = vadd.f32 %v363, %v408
      %v454 = vadd.f32 %v364, %v409
      %v455 = vadd.f32 %v365, %v410
      %v456 = vadd.f32 %v366, %v411
      %v457 = vadd.f32 %v367, %v412
      %v458 = vadd.f32 %v368, %v413
      %v459 = vadd.f32 %v369, %v414
      %v460 = vadd.f32 %v370, %v415
      %v461 = vadd.f32 %v371, %v416
      %v462 = vadd.f32 %v372, %v417
      %v463 = vadd.f32 %v373, %v418
      %v464 = vadd.f32 %v374, %v419
      %v465 = vadd.f32 %v375, %v420
      %v466 = vmul.f32 %v421, 0.25
      %v467 = vmul.f32 %v422, 0.25
      %v468 = vmul.f32 %v423, 0.25
      %v469 = vmul.f32 %v424, 0.25
      %v470 = vmul.f32 %v425, 0.25
      %v471 = vmul.f32 %v426, 0.25
      %v472 = vmul.f32 %v427, 0.25
      %v473 = vmul.f32 %v428, 0.25
      %v474 = vmul.f32 %v429, 0.25
      %v475 = vmul.f32 %v430, 0.25
      %v476 = vmul.f32 %v431, 0.25
      %v477 = vmul.f32 %v432, 0.25
      %v478 = vmul.f32 %v433, 0.25
      %v479 = vmul.f32 %v434, 0.25
      %v480 = vmul.f32 %v435, 0.25
      %v481 = vmul.f32 %v436, 0.25
      %v482 = vmul.f32 %v437, 0.25
      %v483 = vmul.f32 %v438, 0.25
      %v484 = vmul.f32 %v439, 0.25
      %v485 = vmul.f32 %v440, 0.25
      %v486 = vmul.f32 %v441, 0.25
      %v487 = vmul.f32 %v442, 0.25
      %v488 = vmul.f32 %v443, 0.25
      %v489 = vmul.f32 %v444, 0.25
      %v490 = vmul.f32 %v445, 0.25
      %v491 = vmul.f32 %v446, 0.25
      %v492 = vmul.f32 %v447, 0.25
      %v493 = vmul.f32 %v448, 0.25
      %v494 = vmul.f32 %v449, 0.25
      %v495 = vmul.f32 %v450, 0.25
      %v496 = vmul.f32 %v451, 0.25
      %v497 = vmul.f32 %v452, 0.25
      %v498 = vmul.f32 %v453, 0.25
      %v499 = vmul.f32 %v454, 0.25
      %v500 = vmul.f32 %v455, 0.25
      %v501 = vmul.f32 %v456, 0.25
      %v502 = vmul.f32 %v457, 0.25
      %v503 = vmul.f32 %v458, 0.25
      %v504 = vmul.f32 %v459, 0.25
      %v505 = vmul.f32 %v460, 0.25
      %v506 = vmul.f32 %v461, 0.25
      %v507 = vmul.f32 %v462, 0.25
      %v508 = vmul.f32 %v463, 0.25
      %v509 = vmul.f32 %v464, 0.25
      %v510 = vmul.f32 %v465, 0.25
      %vm511 = vcmask 57344
      %512 = vst.msk [vmem:[%s149] sm:$0x1] %vm511, %v466
      %513 = vst.msk [vmem:[%s149 + $0x1] sm:$0x1] %vm511, %v467
      %514 = vst.msk [vmem:[%s149 + $0x2] sm:$0x1] %vm511, %v468
      %515 = vst.msk [vmem:[%s149 + $0x3] sm:$0x1] %vm511, %v469
      %516 = vst.msk [vmem:[%s149 + $0x4] sm:$0x1] %vm511, %v470
      %517 = vst.msk [vmem:[%s149 + $0x5] sm:$0x1] %vm511, %v471
      %518 = vst.msk [vmem:[%s149 + $0x6] sm:$0x1] %vm511, %v472
      %519 = vst.msk [vmem:[%s149 + $0x7] sm:$0x1] %vm511, %v473
      %520 = vst.msk [vmem:[%s149 + $0x8] sm:$0x1] %vm511, %v474
      %521 = vst.msk [vmem:[%s149 + $0x9] sm:$0x1] %vm511, %v475
      %522 = vst.msk [vmem:[%s149 + $0xa] sm:$0x1] %vm511, %v476
      %523 = vst.msk [vmem:[%s149 + $0xb] sm:$0x1] %vm511, %v477
      %524 = vst.msk [vmem:[%s149 + $0xc] sm:$0x1] %vm511, %v478
      %525 = vst.msk [vmem:[%s149 + $0xd] sm:$0x1] %vm511, %v479
      %526 = vst.msk [vmem:[%s149 + $0xe] sm:$0x1] %vm511, %v480
      %527 = vst.msk [vmem:[%s149 + $0xf] sm:$0x1] %vm511, %v481
      %528 = vst.msk [vmem:[%s149 + $0x10] sm:$0x1] %vm511, %v482
      %529 = vst.msk [vmem:[%s149 + $0x11] sm:$0x1] %vm511, %v483
      %530 = vst.msk [vmem:[%s149 + $0x12] sm:$0x1] %vm511, %v484
      %531 = vst.msk [vmem:[%s149 + $0x13] sm:$0x1] %vm511, %v485
      %532 = vst.msk [vmem:[%s149 + $0x14] sm:$0x1] %vm511, %v486
      %533 = vst.msk [vmem:[%s149 + $0x15] sm:$0x1] %vm511, %v487
      %534 = vst.msk [vmem:[%s149 + $0x16] sm:$0x1] %vm511, %v488
      %535 = vst.msk [vmem:[%s149 + $0x17] sm:$0x1] %vm511, %v489
      %536 = vst.msk [vmem:[%s149 + $0x18] sm:$0x1] %vm511, %v490
      %537 = vst.msk [vmem:[%s149 + $0x19] sm:$0x1] %vm511, %v491
      %538 = vst.msk [vmem:[%s149 + $0x1a] sm:$0x1] %vm511, %v492
      %539 = vst.msk [vmem:[%s149 + $0x1b] sm:$0x1] %vm511, %v493
      %540 = vst.msk [vmem:[%s149 + $0x1c] sm:$0x1] %vm511, %v494
      %541 = vst.msk [vmem:[%s149 + $0x1d] sm:$0x1] %vm511, %v495
      %542 = vst.msk [vmem:[%s149 + $0x1e] sm:$0x1] %vm511, %v496
      %543 = vst.msk [vmem:[%s149 + $0x1f] sm:$0x1] %vm511, %v497
      %544 = vst.msk [vmem:[%s149 + $0x20] sm:$0x1] %vm511, %v498
      %545 = vst.msk [vmem:[%s149 + $0x21] sm:$0x1] %vm511, %v499
      %546 = vst.msk [vmem:[%s149 + $0x22] sm:$0x1] %vm511, %v500
      %547 = vst.msk [vmem:[%s149 + $0x23] sm:$0x1] %vm511, %v501
      %548 = vst.msk [vmem:[%s149 + $0x24] sm:$0x1] %vm511, %v502
      %549 = vst.msk [vmem:[%s149 + $0x25] sm:$0x1] %vm511, %v503
      %550 = vst.msk [vmem:[%s149 + $0x26] sm:$0x1] %vm511, %v504
      %551 = vst.msk [vmem:[%s149 + $0x27] sm:$0x1] %vm511, %v505
      %552 = vst.msk [vmem:[%s149 + $0x28] sm:$0x1] %vm511, %v506
      %553 = vst.msk [vmem:[%s149 + $0x29] sm:$0x1] %vm511, %v507
      %554 = vst.msk [vmem:[%s149 + $0x2a] sm:$0x1] %vm511, %v508
      %555 = vst.msk [vmem:[%s149 + $0x2b] sm:$0x1] %vm511, %v509
      %556 = vst.msk [vmem:[%s149 + $0x2c] sm:$0x1] %vm511, %v510
      %s557 = smul.u32 5, %s17
      %p558 = scmp.lt.s32.totalorder %s557, 9
      %s559 = scalar_select %p558, %s557, 9
      %p560 = scmp.lt.s32.totalorder %s16, 0
      %s561 = scalar_select %p560, %s16, 0
      %s562 = smul.addr %s559, 9
      %s563 = sadd.s32 %s561, %s562
      %s564 = scalar_lea.vmem %s1, %s563
      // Predicated region
      $region25: #{avg_pool2d_k2_s2_p1.1} parent=23 // pred_check
        %p565 = pneg %p72
      $region26: #{avg_pool2d_k2_s2_p1.1} parent=23 // pred_check_branch
        %567 = sbr.rel (%p565) target = $region28
      $region27: #{avg_pool2d_k2_s2_p1.1} parent=23 // pred_region
        %s568 = smul.u32 5, %s17
      $region28: #{avg_pool2d_k2_s2_p1.1} parent=23 // pred_fallthru
        _
    $region24: #{avg_pool2d_k2_s2_p1.1} parent=5 // pred_fallthru
      _
    %p569 = scmp.le.s32.totalorder 2, %s7
    // Predicated region
    $region29: #{avg_pool2d_k2_s2_p1.1} parent=5 // pred_check
      %p570 = pneg %p569
    $region30: #{avg_pool2d_k2_s2_p1.1} parent=5 // pred_check_branch
      %572 = sbr.rel (%p570) target = $region32
    $region31: #{avg_pool2d_k2_s2_p1.1} parent=5 // pred_region
      %s573 = ssub.s32 %s7, 2
      // Predicated region
      $region33: #{avg_pool2d_k2_s2_p1.1} parent=31 // pred_check
        %p574 = pneg %p78
      $region34: #{avg_pool2d_k2_s2_p1.1} parent=31 // pred_check_branch
        %576 = sbr.rel (%p574) target = $region36
      $region35: #{avg_pool2d_k2_s2_p1.1} parent=31 // pred_region
        %s577 = smul.u32 5, %s19
        %p578 = scmp.lt.s32.totalorder %s577, 9
        %s579 = scalar_select %p578, %s577, 9
        %p580 = scmp.lt.s32.totalorder %s18, 0
        %s581 = scalar_select %p580, %s18, 0
        %s582 = smul.addr %s579, 9
        %s583 = sadd.s32 %s581, %s582
        %s584 = scalar_lea.vmem %s1, %s583
      $region36: #{avg_pool2d_k2_s2_p1.1} parent=31 // pred_fallthru
        _
    $region32: #{avg_pool2d_k2_s2_p1.1} parent=5 // pred_fallthru
      _
  $region6: #{avg_pool2d_k2_s2_p1.1} parent=0 // loop_footer
    %s11 = sadd.s32 1, %s7
  $region7: #{avg_pool2d_k2_s2_p1.1} parent=0 // loop_footer_branch
    %6 = sbr.rel target = $region3
  $region8: #{avg_pool2d_k2_s2_p1.1} parent=0 // loop_exit
    _

</llo_original>
